<compile_context>
chip_gen: v6e
topology: v6e:2x2x1
jax: 0.10.0
libtpu: 0.0.40
codegen_flags: <defaults>
</compile_context>

<pallas_src>
import jax
import jax.numpy as jnp
from jax.experimental import pallas as pl
from jax.experimental.pallas import tpu as pltpu

_MIB = 1024 * 1024


# ----------------------------------------------------------------------------
# Glue: output-size logic (torchvision semantics) and bilinear weight matrices
# ----------------------------------------------------------------------------
def _compute_output_size(in_h, in_w, size, max_size=None):
    """torchvision _compute_resized_output_size semantics (int() truncation)."""
    if isinstance(size, (tuple, list)) and len(size) == 2:
        if max_size is not None:
            raise ValueError(
                "max_size is only supported when size specifies the shorter edge")
        return int(size[0]), int(size[1])
    if isinstance(size, (tuple, list)):
        size = size[0]
    short, long = (in_h, in_w) if in_h <= in_w else (in_w, in_h)
    new_short = int(size)
    new_long = int(size * long / short)          # truncation, like torchvision
    if max_size is not None:
        if max_size <= new_short:
            raise ValueError("max_size must be strictly greater than size")
        if new_long > max_size:
            new_short = int(max_size * new_short / new_long)
            new_long = int(max_size)
    if in_h <= in_w:
        return new_short, new_long
    return new_long, new_short


def _bilinear_weight_matrix(in_size, out_size):
    """A (out_size, in_size) f32 s.t. A @ x bilinearly resizes along that axis.

    Matches PyTorch upsample_bilinear2d (align_corners=False, no antialias).
    """
    scale = in_size / out_size
    j = jnp.arange(out_size, dtype=jnp.float32)
    src = jnp.maximum((j + 0.5) * scale - 0.5, 0.0)
    i0 = jnp.clip(jnp.floor(src).astype(jnp.int32), 0, in_size - 1)
    i1 = jnp.clip(i0 + 1, 0, in_size - 1)
    w1 = src - i0.astype(jnp.float32)
    w0 = 1.0 - w1
    rows = jnp.arange(out_size)
    A = jnp.zeros((out_size, in_size), jnp.float32)
    A = A.at[rows, i0].add(w0)
    A = A.at[rows, i1].add(w1)
    return A


# ----------------------------------------------------------------------------
# Pallas kernel factory
# ----------------------------------------------------------------------------
def _loop_planes(num_planes, stride, body, unroll_max=4):
    """Run body(b, b*stride) for b in [0, num_planes); fori_loop above unroll_max."""
    if num_planes <= unroll_max:
        for b in range(num_planes):
            body(b, b * stride)
    else:
        def loop_body(b, carry):
            body(b, pl.multiple_of(b * stride, stride))
            return carry
        jax.lax.fori_loop(0, num_planes, loop_body, 0)


def _make_resize_kernel(B, H, W, out_h, out_w, w_first, batched,
                        compute_dtype, out_dtype):
    out_is_int = jnp.issubdtype(jnp.dtype(out_dtype), jnp.integer)
    if out_is_int:
        info = jnp.iinfo(out_dtype)
        lo, hi = float(info.min), float(info.max)

    def _finalize(res_f32):
        if out_is_int:
            res_f32 = jnp.clip(jnp.round(res_f32), lo, hi)
        return res_f32.astype(out_dtype)

    # TODO(synk): 2-tap VPU/gather height pass for heavy downscales (A_h is 2/H sparse).

    if w_first and batched:
        # Width shrinks more and H is sublane-aligned: pass 1 is one big MXU matmul
        # (B*H, W) @ (W, out_w) fed straight from the input block (no staging copy);
        # pass 2 is per-plane (out_h, H) @ (H, out_w) from the shared tmp scratch.
        def kernel(x_ref, ah_ref, awt_ref, o_ref, tmp_ref):
            ah = ah_ref[...]                       # (out_h, H)
            awt = awt_ref[...]                     # (W, out_w)
            x2d = x_ref[...].reshape(B * H, W).astype(compute_dtype)
            tmp_ref[...] = jnp.dot(
                x2d, awt, preferred_element_type=jnp.float32).astype(compute_dtype)

            def plane(b, row0):
                res = jnp.dot(ah, tmp_ref[pl.ds(row0, H), :],
                              preferred_element_type=jnp.float32)
                o_ref[b] = _finalize(res)

            _loop_planes(B, H, plane)

    elif w_first:
        # Fallback (H not sublane-aligned): fully per-plane, ref-slice ops only.
        def kernel(x_ref, ah_ref, awt_ref, o_ref):
            ah = ah_ref[...]
            awt = awt_ref[...]

            def plane(b, _):
                t = jnp.dot(x_ref[b].astype(compute_dtype), awt,
                            preferred_element_type=jnp.float32).astype(compute_dtype)
                res = jnp.dot(ah, t, preferred_element_type=jnp.float32)
                o_ref[b] = _finalize(res)

            _loop_planes(B, H, plane)

    elif batched:
        # Height shrinks at least as much: per-plane height pass into a (B*out_h, W)
        # scratch, then one big (B*out_h, W) @ (W, out_w) MXU matmul and a single
        # dense reshape store (out_h is 8-aligned, so the reshape is layout-free).
        def kernel(x_ref, ah_ref, awt_ref, o_ref, tmp_ref):
            ah = ah_ref[...]                       # (out_h, H)
            awt = awt_ref[...]                     # (W, out_w)

            def plane(b, row0):
                tmp_ref[pl.ds(row0, out_h), :] = jnp.dot(
                    ah, x_ref[b].astype(compute_dtype),
                    preferred_element_type=jnp.float32).astype(compute_dtype)

            _loop_planes(B, out_h, plane)
            res = jnp.dot(tmp_ref[...], awt, preferred_element_type=jnp.float32)
            o_ref[...] = _finalize(res.reshape(B, out_h, out_w))

    else:
        # Fallback (out_h not 8-aligned): fully per-plane, ref-slice ops only.
        def kernel(x_ref, ah_ref, awt_ref, o_ref):
            ah = ah_ref[...]
            awt = awt_ref[...]

            def plane(b, _):
                t = jnp.dot(ah, x_ref[b].astype(compute_dtype),
                            preferred_element_type=jnp.float32).astype(compute_dtype)
                res = jnp.dot(t, awt, preferred_element_type=jnp.float32)
                o_ref[b] = _finalize(res)

            _loop_planes(B, out_h, plane)

    return kernel


# ----------------------------------------------------------------------------
# Block-size / VMEM planning (generation aware)
# ----------------------------------------------------------------------------
def _tpu_vmem_info():
    """(per-core VMEM bytes, likely-2-TensorCore chip?) with a safe fallback."""
    try:
        cap = int(pltpu.get_tpu_info().vmem_capacity_bytes)
    except Exception:                      # no info available -> conservative defaults
        cap = 64 * _MIB
    # v7x-like parts have 64 MiB per TensorCore and 2 TensorCores per chip.
    return cap, cap <= 64 * _MIB


def _plan(NC, H, W, out_h, out_w, in_itemsize, cd_itemsize, w_first, batched,
          max_planes_per_step=64):
    """Choose planes-per-step, padded plane count, and the scoped-VMEM limit."""
    cap, two_cores = _tpu_vmem_info()
    budget = max(8 * _MIB, int(cap * 0.40))   # ~51 MiB on v5e/v6e, ~25 MiB on v7x

    out_itemsize = in_itemsize
    if w_first:
        per_plane = (2 * H * W * in_itemsize             # double-buffered input block
                     + 2 * out_h * out_w * out_itemsize   # double-buffered output block
                     + H * out_w * cd_itemsize            # pass-1 rows (scratch/transient)
                     + (H * W * cd_itemsize if batched else 0)  # casted pass-1 operand
                     + out_h * out_w * 4)                 # f32 pass-2 result
        fixed_extra = 0 if batched else H * W * cd_itemsize
    else:
        per_plane = (2 * H * W * in_itemsize
                     + 2 * out_h * out_w * out_itemsize
                     + out_h * W * cd_itemsize            # pass-1 rows (scratch/transient)
                     + out_h * out_w * 4)                 # f32 pass-2 result share
        fixed_extra = H * W * cd_itemsize                 # one casted plane live at a time
    fixed = 2 * (out_h * H + W * out_w) * cd_itemsize + fixed_extra  # pipelined weights

    b_fit = max(1, (budget - fixed) // per_plane)
    b_cap = NC
    if two_cores and NC >= 2:
        b_cap = max(1, NC // 2)    # keep >= 2 grid steps so both TensorCores get work
    b_target = int(max(1, min(b_fit, b_cap, max_planes_per_step, NC)))

    divisors = [d for d in range(1, b_target + 1) if NC % d == 0]
    if two_cores:
        even = [d for d in divisors if (NC // d) % 2 == 0]
        divisors = even if even else divisors
    best_div = max(divisors)

    steps_div = NC // best_div
    steps_pad = -(-NC // b_target)
    if steps_pad < steps_div:       # pad the plane axis rather than shrink the batch
        bpp, padded_nc = b_target, steps_pad * b_target
    else:
        bpp, padded_nc = best_div, NC

    need = fixed + per_plane * bpp
    vmem_limit = int(min(max(2 * need, 32 * _MIB), int(cap * 0.85)))
    if need > vmem_limit:           # best effort for very large planes
        vmem_limit = int(min(need + 2 * _MIB, int(cap * 0.95)))
    return bpp, padded_nc, vmem_limit


# ----------------------------------------------------------------------------
# Host-side wrapper around pallas_call
# ----------------------------------------------------------------------------
def _bilinear_resize_nchw(x, out_h, out_w, compute_dtype=jnp.bfloat16):
    """x: (N, C, H, W) any real dtype -> (N, C, out_h, out_w), same dtype."""
    N, C, H, W = x.shape
    NC = N * C
    out_dtype = x.dtype

    if (out_h, out_w) == (H, W):          # torchvision fast path: size unchanged
        return x

    # Apply the more-shrinking axis first (fewer MACs, smaller intermediate).
    w_first = H * out_w * (W + out_h) < out_h * W * (H + out_w)
    # Whether the shared-RHS pass can run as one big sublane-aligned matmul.
    in_sublane = 8 * max(1, 4 // jnp.dtype(x.dtype).itemsize)
    batched = (H % in_sublane == 0) if w_first else (out_h % 8 == 0)

    a_h = _bilinear_weight_matrix(H, out_h).astype(compute_dtype)                   # (out_h, H)
    a_w_t = jnp.transpose(_bilinear_weight_matrix(W, out_w)).astype(compute_dtype)  # (W, out_w)

    bpp, padded_nc, vmem_limit = _plan(
        NC, H, W, out_h, out_w,
        jnp.dtype(x.dtype).itemsize, jnp.dtype(compute_dtype).itemsize,
        w_first, batched)

    if batched:
        tmp_shape = (bpp * H, out_w) if w_first else (bpp * out_h, W)
        scratch_shapes = [pltpu.VMEM(tmp_shape, compute_dtype)]
    else:
        scratch_shapes = []

    kernel = _make_resize_kernel(bpp, H, W, out_h, out_w, w_first, batched,
                                 compute_dtype, out_dtype)

    x_flat = x.reshape(NC, H, W)
    if padded_nc != NC:
        pad = jnp.zeros((padded_nc - NC, H, W), x.dtype)
        x_flat = jnp.concatenate([x_flat, pad], axis=0)

    out_flat = pl.pallas_call(
        kernel,
        out_shape=jax.ShapeDtypeStruct((padded_nc, out_h, out_w), out_dtype),
        grid_spec=pltpu.PrefetchScalarGridSpec(
            num_scalar_prefetch=0,
            grid=(padded_nc // bpp,),
            in_specs=[
                pl.BlockSpec((bpp, H, W), lambda i: (i, 0, 0)),
                pl.BlockSpec((out_h, H), lambda i: (0, 0)),
                pl.BlockSpec((W, out_w), lambda i: (0, 0)),
            ],
            out_specs=pl.BlockSpec((bpp, out_h, out_w), lambda i: (i, 0, 0)),
            scratch_shapes=scratch_shapes,
        ),
        compiler_params=pltpu.CompilerParams(
            dimension_semantics=("parallel",),
            vmem_limit_bytes=vmem_limit),
    )(x_flat, a_h, a_w_t)

    if padded_nc != NC:
        out_flat = out_flat[:NC]
    return out_flat.reshape(N, C, out_h, out_w)


# ----------------------------------------------------------------------------
# Module-equivalent wrapper
# ----------------------------------------------------------------------------
class GroupResizeResize:
    """JAX/Pallas port of the PyTorch GroupResizeResize module.

    forward(img_group): list of (C, H, W) images -> list of resized images,
    bilinear interpolation (antialias off), torchvision size / max_size semantics.
    """

    def __init__(self, size, interpolation=None, max_size=None, antialias=None,
                 compute_dtype=jnp.bfloat16):
        self.size = size
        self.max_size = max_size
        self.interpolation = interpolation   # forced to BILINEAR in the reference module
        # TODO(synk): antialias=True (area-averaged taps) is not implemented; the
        # default antialias=None/False path matches upsample_bilinear2d exactly.
        self.antialias = antialias
        self.compute_dtype = compute_dtype   # bf16 MXU path; jnp.float32 for exactness

    def __call__(self, img_group):
        return self.forward(img_group)

    def forward(self, img_group):
        if not img_group:
            return []
        results = [None] * len(img_group)
        # Bucket images by (shape, dtype) so each bucket is one batched pallas_call.
        buckets = {}
        for idx, im in enumerate(img_group):
            im = jnp.asarray(im)
            key = (tuple(im.shape), jnp.dtype(im.dtype).name)
            buckets.setdefault(key, []).append((idx, im))
        for (shape, _), items in buckets.items():
            idxs = [i for i, _ in items]
            imgs = jnp.stack([im for _, im in items], axis=0)   # (n, C, H, W)
            H, W = shape[-2], shape[-1]
            out_h, out_w = _compute_output_size(H, W, self.size, self.max_size)
            squeeze = False
            if imgs.ndim == 3:                  # grayscale (n, H, W) -> add channel
                imgs = imgs[:, None]
                squeeze = True
            out = _bilinear_resize_nchw(imgs, out_h, out_w,
                                        compute_dtype=self.compute_dtype)
            if squeeze:
                out = out[:, 0]
            for j, i in enumerate(idxs):
                results[i] = out[j]
        return results


# ----------------------------------------------------------------------------
# Demo / self-test
# ----------------------------------------------------------------------------
def _axis_resize_ref(x, out_size, axis):
    """Pure-JAX 2-tap bilinear resize along one axis (gather based, full f32)."""
    in_size = x.shape[axis]
    scale = in_size / out_size
    j = jnp.arange(out_size, dtype=jnp.float32)
    src = jnp.maximum((j + 0.5) * scale - 0.5, 0.0)
    i0 = jnp.clip(jnp.floor(src).astype(jnp.int32), 0, in_size - 1)
    i1 = jnp.clip(i0 + 1, 0, in_size - 1)
    w1 = src - i0.astype(jnp.float32)
    w0 = 1.0 - w1
    x0 = jnp.take(x, i0, axis=axis)
    x1 = jnp.take(x, i1, axis=axis)
    shp = [1] * x.ndim
    shp[axis] = out_size
    return x0 * w0.reshape(shp) + x1 * w1.reshape(shp)


def _reference_resize(x, out_h, out_w):
    """Pure-JAX f32 reference: gather-based bilinear, no matmuls, no Pallas."""
    y = _axis_resize_ref(x.astype(jnp.float32), out_h, axis=2)
    return _axis_resize_ref(y, out_w, axis=3)


if __name__ == "__main__":
    key = jax.random.PRNGKey(0)
    N, C, H, W = 2, 4, 16, 16          # group of 2 images, 4 channels, 16x16
    k1, k2 = jax.random.split(key)
    img_group = [
        jax.random.uniform(k1, (C, H, W), dtype=jnp.float32),
        jax.random.uniform(k2, (C, H, W), dtype=jnp.float32),
    ]
    stacked = jnp.stack(img_group, axis=0)

    # (a) int size (shorter edge -> 8): height-pass-first, batched width matmul.
    mod_a = GroupResizeResize(size=8, max_size=None, antialias=None)
    out_a = [jax.block_until_ready(o) for o in mod_a(img_group)]
    oh, ow = _compute_output_size(H, W, 8, None)
    ref_a = _reference_resize(stacked, oh, ow)
    got_a = jnp.stack(out_a, axis=0)
    assert got_a.shape == (N, C, oh, ow), got_a.shape
    assert float(jnp.max(jnp.abs(got_a.astype(jnp.float32) - ref_a))) < 3e-2

    # (b) tuple size (12, 4): width shrinks more -> width-pass-first branch.
    mod_b = GroupResizeResize(size=(12, 4), max_size=None, antialias=None)
    out_b = [jax.block_until_ready(o) for o in mod_b(img_group)]
    ref_b = _reference_resize(stacked, 12, 4)
    got_b = jnp.stack(out_b, axis=0)
    assert got_b.shape == (N, C, 12, 4), got_b.shape
    assert float(jnp.max(jnp.abs(got_b.astype(jnp.float32) - ref_b))) < 3e-2

    # (c) float32 compute path (tighter tolerance).
    mod_c = GroupResizeResize(size=8, max_size=None, antialias=None,
                              compute_dtype=jnp.float32)
    out_c = [jax.block_until_ready(o) for o in mod_c(img_group)]
    got_c = jnp.stack(out_c, axis=0)
    assert float(jnp.max(jnp.abs(got_c - ref_a))) < 1e-3

    print("KERNEL_OK")
</pallas_src>

<mosaic_0001>
module attributes {stable_mosaic.version = 11 : i64} {
  func.func @kernel(%arg0: i32, %arg1: memref<4x16x16xf32, #tpu.memory_space<vmem>>, %arg2: memref<8x16xbf16, #tpu.memory_space<vmem>>, %arg3: memref<16x8xbf16, #tpu.memory_space<vmem>>, %arg4: memref<4x8x8xf32, #tpu.memory_space<vmem>>, %arg5: memref<32x16xbf16, #tpu.memory_space<vmem>>) attributes {dimension_semantics = [#tpu.dimension_semantics<parallel>], iteration_bounds = array<i64: 2>, scalar_prefetch = 0 : i64, scratch_operands = 1 : i64, tpu.core_type = #tpu.core_type<tc>, window_params = [{transform_indices = @transform_0, window_bounds = array<i64: 4, 16, 16>}, {pipeline_mode = #tpu.pipeline_mode<synchronous>, transform_indices = @transform_1, window_bounds = array<i64: 8, 16>}, {pipeline_mode = #tpu.pipeline_mode<synchronous>, transform_indices = @transform_2, window_bounds = array<i64: 16, 8>}, {transform_indices = @transform_3, window_bounds = array<i64: 4, 8, 8>}]} {
    %c0 = arith.constant 0 : index
    %c0_0 = arith.constant 0 : index
    %0 = vector.load %arg2[%c0, %c0_0] : memref<8x16xbf16, #tpu.memory_space<vmem>>, vector<8x16xbf16>
    %c0_1 = arith.constant 0 : index
    %c0_2 = arith.constant 0 : index
    %1 = vector.load %arg3[%c0_1, %c0_2] : memref<16x8xbf16, #tpu.memory_space<vmem>>, vector<16x8xbf16>
    %c0_3 = arith.constant 0 : index
    %c0_4 = arith.constant 0 : index
    %c0_5 = arith.constant 0 : index
    %2 = vector.load %arg1[%c0_3, %c0_4, %c0_5] : memref<4x16x16xf32, #tpu.memory_space<vmem>>, vector<1x16x16xf32>
    %3 = vector.shape_cast %2 : vector<1x16x16xf32> to vector<16x16xf32>
    %4 = arith.truncf %3 : vector<16x16xf32> to vector<16x16xbf16>
    %cst = arith.constant dense<0.000000e+00> : vector<8x16xf32>
    %5 = tpu.matmul %0, %4, %cst {dimension_numbers = #tpu.dot_dimension_numbers<[1], [0], [0], [1], [0, 0, 1, 1], [], []>} : vector<8x16xbf16>, vector<16x16xbf16>, vector<8x16xf32> -> vector<8x16xf32>
    %6 = arith.truncf %5 : vector<8x16xf32> to vector<8x16xbf16>
    %c0_6 = arith.constant 0 : index
    %c0_7 = arith.constant 0 : index
    %7 = vector.load %arg5[%c0_6, %c0_7] : memref<32x16xbf16, #tpu.memory_space<vmem>>, vector<8x16xbf16>
    tpu.vector_store %arg5[%c0_6, %c0_7], %6 {strides = array<i32>} : memref<32x16xbf16, #tpu.memory_space<vmem>>, vector<8x16xbf16>,
    %c1 = arith.constant 1 : index
    %c0_8 = arith.constant 0 : index
    %c0_9 = arith.constant 0 : index
    %8 = vector.load %arg1[%c1, %c0_8, %c0_9] : memref<4x16x16xf32, #tpu.memory_space<vmem>>, vector<1x16x16xf32>
    %9 = vector.shape_cast %8 : vector<1x16x16xf32> to vector<16x16xf32>
    %10 = arith.truncf %9 : vector<16x16xf32> to vector<16x16xbf16>
    %cst_10 = arith.constant dense<0.000000e+00> : vector<8x16xf32>
    %11 = tpu.matmul %0, %10, %cst_10 {dimension_numbers = #tpu.dot_dimension_numbers<[1], [0], [0], [1], [0, 0, 1, 1], [], []>} : vector<8x16xbf16>, vector<16x16xbf16>, vector<8x16xf32> -> vector<8x16xf32>
    %12 = arith.truncf %11 : vector<8x16xf32> to vector<8x16xbf16>
    %c8 = arith.constant 8 : index
    %c0_11 = arith.constant 0 : index
    %13 = vector.load %arg5[%c8, %c0_11] : memref<32x16xbf16, #tpu.memory_space<vmem>>, vector<8x16xbf16>
    tpu.vector_store %arg5[%c8, %c0_11], %12 {strides = array<i32>} : memref<32x16xbf16, #tpu.memory_space<vmem>>, vector<8x16xbf16>,
    %c2 = arith.constant 2 : index
    %c0_12 = arith.constant 0 : index
    %c0_13 = arith.constant 0 : index
    %14 = vector.load %arg1[%c2, %c0_12, %c0_13] : memref<4x16x16xf32, #tpu.memory_space<vmem>>, vector<1x16x16xf32>
    %15 = vector.shape_cast %14 : vector<1x16x16xf32> to vector<16x16xf32>
    %16 = arith.truncf %15 : vector<16x16xf32> to vector<16x16xbf16>
    %cst_14 = arith.constant dense<0.000000e+00> : vector<8x16xf32>
    %17 = tpu.matmul %0, %16, %cst_14 {dimension_numbers = #tpu.dot_dimension_numbers<[1], [0], [0], [1], [0, 0, 1, 1], [], []>} : vector<8x16xbf16>, vector<16x16xbf16>, vector<8x16xf32> -> vector<8x16xf32>
    %18 = arith.truncf %17 : vector<8x16xf32> to vector<8x16xbf16>
    %c16 = arith.constant 16 : index
    %c0_15 = arith.constant 0 : index
    %19 = vector.load %arg5[%c16, %c0_15] : memref<32x16xbf16, #tpu.memory_space<vmem>>, vector<8x16xbf16>
    tpu.vector_store %arg5[%c16, %c0_15], %18 {strides = array<i32>} : memref<32x16xbf16, #tpu.memory_space<vmem>>, vector<8x16xbf16>,
    %c3 = arith.constant 3 : index
    %c0_16 = arith.constant 0 : index
    %c0_17 = arith.constant 0 : index
    %20 = vector.load %arg1[%c3, %c0_16, %c0_17] : memref<4x16x16xf32, #tpu.memory_space<vmem>>, vector<1x16x16xf32>
    %21 = vector.shape_cast %20 : vector<1x16x16xf32> to vector<16x16xf32>
    %22 = arith.truncf %21 : vector<16x16xf32> to vector<16x16xbf16>
    %cst_18 = arith.constant dense<0.000000e+00> : vector<8x16xf32>
    %23 = tpu.matmul %0, %22, %cst_18 {dimension_numbers = #tpu.dot_dimension_numbers<[1], [0], [0], [1], [0, 0, 1, 1], [], []>} : vector<8x16xbf16>, vector<16x16xbf16>, vector<8x16xf32> -> vector<8x16xf32>
    %24 = arith.truncf %23 : vector<8x16xf32> to vector<8x16xbf16>
    %c24 = arith.constant 24 : index
    %c0_19 = arith.constant 0 : index
    %25 = vector.load %arg5[%c24, %c0_19] : memref<32x16xbf16, #tpu.memory_space<vmem>>, vector<8x16xbf16>
    tpu.vector_store %arg5[%c24, %c0_19], %24 {strides = array<i32>} : memref<32x16xbf16, #tpu.memory_space<vmem>>, vector<8x16xbf16>,
    %c0_20 = arith.constant 0 : index
    %c0_21 = arith.constant 0 : index
    %26 = vector.load %arg5[%c0_20, %c0_21] : memref<32x16xbf16, #tpu.memory_space<vmem>>, vector<32x16xbf16>
    %cst_22 = arith.constant dense<0.000000e+00> : vector<32x8xf32>
    %27 = tpu.matmul %26, %1, %cst_22 {dimension_numbers = #tpu.dot_dimension_numbers<[1], [0], [0], [1], [0, 0, 1, 1], [], []>} : vector<32x16xbf16>, vector<16x8xbf16>, vector<32x8xf32> -> vector<32x8xf32>
    %28 = vector.shape_cast %27 : vector<32x8xf32> to vector<4x8x8xf32>
    %c0_23 = arith.constant 0 : index
    %c0_24 = arith.constant 0 : index
    %c0_25 = arith.constant 0 : index
    %29 = vector.load %arg4[%c0_23, %c0_24, %c0_25] : memref<4x8x8xf32, #tpu.memory_space<vmem>>, vector<4x8x8xf32>
    tpu.vector_store %arg4[%c0_23, %c0_24, %c0_25], %28 {strides = array<i32>} : memref<4x8x8xf32, #tpu.memory_space<vmem>>, vector<4x8x8xf32>,
    return
  }
  func.func @transform_0(%arg0: i32) -> (i32, i32, i32) {
    %c0_i32 = arith.constant 0 : i32
    %c0_i32_0 = arith.constant 0 : i32
    %c0_i32_1 = arith.constant 0 : i32
    return %arg0, %c0_i32, %c0_i32_0 : i32, i32, i32
  }
  func.func @transform_1(%arg0: i32) -> (i32, i32) {
    %c0_i32 = arith.constant 0 : i32
    %c0_i32_0 = arith.constant 0 : i32
    %c0_i32_1 = arith.constant 0 : i32
    return %c0_i32, %c0_i32_0 : i32, i32
  }
  func.func @transform_2(%arg0: i32) -> (i32, i32) {
    %c0_i32 = arith.constant 0 : i32
    %c0_i32_0 = arith.constant 0 : i32
    %c0_i32_1 = arith.constant 0 : i32
    return %c0_i32, %c0_i32_0 : i32, i32
  }
  func.func @transform_3(%arg0: i32) -> (i32, i32, i32) {
    %c0_i32 = arith.constant 0 : i32
    %c0_i32_0 = arith.constant 0 : i32
    %c0_i32_1 = arith.constant 0 : i32
    return %arg0, %c0_i32, %c0_i32_0 : i32, i32, i32
  }
}

</mosaic_0001>

<llo_original>
// kernel: tpu_custom_call.1
$region0: #{tpu_custom_call.1}
  #allocation0 [shape = 'u32[]', space=smem, size = 0x4, offset = 0x4, fixed_abs, tag = 'smem constant byte address 0x4 - core index']
  #allocation1 [shape = 'u32[144,128]{1,0:T(1,128)}', space=vmem, size = 0x12000, scoped, tag = 'internal scratch']
  #allocation2 [shape = 'bf16[32,16]{1,0:T(8,128)(2,1)}', space=vmem, size = 0x2000, scoped, tag = 'scratch operand']
  %s0 = inlined_call_operand.hbm [shape: f32[8,16,16], index: 0, kind: input, shape index: {}]
  %s1 = inlined_call_operand.vmem [shape: bf16[8,16], index: 1, kind: input, shape index: {}]
  %s2 = inlined_call_operand.vmem [shape: bf16[16,8], index: 2, kind: input, shape index: {}]
  %s3 = inlined_call_operand.hbm [shape: f32[8,8,8], index: 3, kind: output, shape index: {}]
  %s4 = sld [smem:[#allocation0]]
  $region49: #{tpu_custom_call.1} parent=0
    _
  %s6 = ssub.s32 1, %s4
  %s7 = scalar_select 0, %s6, %s4
  $region1: #{tpu_custom_call.1} parent=0
    #allocation3 [shape = 'u8[65536]{0}', space=vmem, size = 0x10000, scoped, tag = 'input window, operand 0']
    #allocation4 [shape = 's32[2]{0}', space=sflag, size = 0x8, scoped, tag = 'scoped memory for tpu_custom_call.1']
    #allocation5 [shape = 's32[2]{0}', space=sflag, size = 0x8, scoped, tag = 'scoped memory for tpu_custom_call.1']
    #allocation6 [shape = 'u8[32768]{0}', space=vmem, size = 0x8000, scoped, tag = 'output window, operand 0']
    %8 = vsyncpa [#allocation4], 0
    %s9 = scalar_lea.sflag [#allocation4], 1
    %10 = vsyncpa %s9, 0
    %11 = vsyncpa [#allocation5], 0
    %s12 = scalar_lea.sflag [#allocation5], 1
    %13 = vsyncpa %s12, 0
    loop: start=0, step=1, limit=4
    $region2: #{tpu_custom_call.1} parent=1 // loop_pre_header
      _
    $region3: #{tpu_custom_call.1} parent=1 // loop_header
      %s15 = sphi 0, %s19
      %p16 = scmp.ge.s32.totalorder %s15, 4
      %s25 = sphi 0, %s27
      %s28 = sphi 0, %s25
      %s29 = sphi 0, %s28
      %s45 = sphi 0, %s29
      %s49 = sphi 0, %s49
      %s51 = sphi 0, %s49
      %s52 = sphi 0, %s51
      %s66 = sphi 0, %s52
      %s70 = sphi 0, %s70
      %s72 = sphi 0, %s70
      %s73 = sphi 0, %s72
      %s87 = sphi 0, %s73
      %s93 = sphi 0, %s95
      %s96 = sphi 0, %s93
      %s97 = sphi 0, %s96
      %s113 = sphi 0, %s97
    $region4: #{tpu_custom_call.1} parent=1 // loop_header_branch
      %18 = sbr.rel (%p16) target = $region8
    $region5: #{tpu_custom_call.1} parent=1 // loop_body
      %s20 = ssub.s32 %s15, 1
      %s21 = ssub.s32 %s15, 2
      %s22 = sadd.s32 %s15, 1
      %s23 = ssub.s32 %s15, %s22
      %p24 = scmp.eq.s32.totalorder %s23, 0
      %s26 = sadd.s32 %s25, 1
      %s27 = scalar_select %p24, %s25, %s26
      %p30 = pneg %p24
      %p31 = scmp.eq.s32.totalorder %s15, 1
      %p32 = por %p30, %p31
      %p33 = scmp.ne.s32.totalorder %s25, %s28
      %p34 = scmp.eq.s32.totalorder %s15, 0
      %p35 = por %p33, %p34
      %p36 = scmp.ne.s32.totalorder %s25, %s28
      %p37 = scmp.eq.s32.totalorder %s20, 1
      %p38 = por %p36, %p37
      %p39 = scmp.ne.s32.totalorder %s28, %s29
      %p40 = scmp.eq.s32.totalorder %s20, 0
      %p41 = por %p39, %p40
      %p42 = scmp.ne.s32.totalorder %s28, %s29
      %p43 = scmp.eq.s32.totalorder %s21, 1
      %p44 = por %p42, %p43
      %p46 = scmp.ne.s32.totalorder %s29, %s45
      %p47 = scmp.eq.s32.totalorder %s21, 0
      %p48 = por %p46, %p47
      %s50 = sadd.s32 %s49, 1
      %p53 = scmp.eq.s32.totalorder %s15, 1
      %p54 = scmp.ne.s32.totalorder %s49, %s51
      %p55 = scmp.eq.s32.totalorder %s15, 0
      %p56 = por %p54, %p55
      %p57 = scmp.ne.s32.totalorder %s49, %s51
      %p58 = scmp.eq.s32.totalorder %s20, 1
      %p59 = por %p57, %p58
      %p60 = scmp.ne.s32.totalorder %s51, %s52
      %p61 = scmp.eq.s32.totalorder %s20, 0
      %p62 = por %p60, %p61
      %p63 = scmp.ne.s32.totalorder %s51, %s52
      %p64 = scmp.eq.s32.totalorder %s21, 1
      %p65 = por %p63, %p64
      %p67 = scmp.ne.s32.totalorder %s52, %s66
      %p68 = scmp.eq.s32.totalorder %s21, 0
      %p69 = por %p67, %p68
      %s71 = sadd.s32 %s70, 1
      %p74 = scmp.eq.s32.totalorder %s15, 1
      %p75 = scmp.ne.s32.totalorder %s70, %s72
      %p76 = scmp.eq.s32.totalorder %s15, 0
      %p77 = por %p75, %p76
      %p78 = scmp.ne.s32.totalorder %s70, %s72
      %p79 = scmp.eq.s32.totalorder %s20, 1
      %p80 = por %p78, %p79
      %p81 = scmp.ne.s32.totalorder %s72, %s73
      %p82 = scmp.eq.s32.totalorder %s20, 0
      %p83 = por %p81, %p82
      %p84 = scmp.ne.s32.totalorder %s72, %s73
      %p85 = scmp.eq.s32.totalorder %s21, 1
      %p86 = por %p84, %p85
      %p88 = scmp.ne.s32.totalorder %s73, %s87
      %p89 = scmp.eq.s32.totalorder %s21, 0
      %p90 = por %p88, %p89
      %s91 = ssub.s32 %s15, %s22
      %p92 = scmp.eq.s32.totalorder %s91, 0
      %s94 = sadd.s32 %s93, 1
      %s95 = scalar_select %p92, %s93, %s94
      %p98 = pneg %p92
      %p99 = scmp.eq.s32.totalorder %s15, 1
      %p100 = por %p98, %p99
      %p101 = scmp.ne.s32.totalorder %s93, %s96
      %p102 = scmp.eq.s32.totalorder %s15, 0
      %p103 = por %p101, %p102
      %p104 = scmp.ne.s32.totalorder %s93, %s96
      %p105 = scmp.eq.s32.totalorder %s20, 1
      %p106 = por %p104, %p105
      %p107 = scmp.ne.s32.totalorder %s96, %s97
      %p108 = scmp.eq.s32.totalorder %s20, 0
      %p109 = por %p107, %p108
      %p110 = scmp.ne.s32.totalorder %s96, %s97
      %p111 = scmp.eq.s32.totalorder %s21, 1
      %p112 = por %p110, %p111
      %p114 = scmp.ne.s32.totalorder %s97, %s113
      %p115 = scmp.eq.s32.totalorder %s21, 0
      %p116 = por %p114, %p115
      %p117 = scmp.le.s32.totalorder 1, %s15
      %p118 = scmp.lt.s32.totalorder %s15, 3
      %p119 = pnand %p117, %p118
      %p120 = pneg %p119
      // Predicated region
      $region9: #{tpu_custom_call.1} parent=5 // pred_check
        _
      $region10: #{tpu_custom_call.1} parent=5 // pred_check_branch
        %122 = sbr.rel (%p119) target = $region12
      $region11: #{tpu_custom_call.1} parent=5 // pred_region
        %s123 = ssub.s32 %s15, 1
        // Predicated region
        $region13: #{tpu_custom_call.1} parent=11 // pred_check
          %p124 = pneg %p62
        $region14: #{tpu_custom_call.1} parent=11 // pred_check_branch
          %126 = sbr.rel (%p124) target = $region16
        $region15: #{tpu_custom_call.1} parent=11 // pred_region
          _
        $region16: #{tpu_custom_call.1} parent=11 // pred_fallthru
          _
        // Predicated region
        $region17: #{tpu_custom_call.1} parent=11 // pred_check
          %p127 = pneg %p83
        $region18: #{tpu_custom_call.1} parent=11 // pred_check_branch
          %129 = sbr.rel (%p127) target = $region20
        $region19: #{tpu_custom_call.1} parent=11 // pred_region
          _
        $region20: #{tpu_custom_call.1} parent=11 // pred_fallthru
          _
      $region12: #{tpu_custom_call.1} parent=5 // pred_fallthru
        _
      %p130 = scmp.lt.s32.totalorder %s15, 2
      // Predicated region
      $region21: #{tpu_custom_call.1} parent=5 // pred_check
        %p131 = pneg %p130
      $region22: #{tpu_custom_call.1} parent=5 // pred_check_branch
        %133 = sbr.rel (%p131) target = $region24
      $region23: #{tpu_custom_call.1} parent=5 // pred_region
        // Predicated region
        $region25: #{tpu_custom_call.1} parent=23 // pred_check
          %p134 = pneg %p35
        $region26: #{tpu_custom_call.1} parent=23 // pred_check_branch
          %136 = sbr.rel (%p134) target = $region28
        $region27: #{tpu_custom_call.1} parent=23 // pred_region
          %s137 = sand.u32 %s25, 1
          %s138 = scalar_lea.sflag [#allocation4], %s137
          %s139 = sand.u32 %s25, 1
          %s140 = smul.addr %s139, 64
          %s141 = scalar_lea.vmem [#allocation3], %s140
          %s142 = smul.u32 4, %s15
          %s144 = ssub.s32 1024, 1024
          %145 = vsyncadd %s138, %s144
          %s146 = smul.addr %s142, 2
          %s147 = smul.addr %s146, 128
          %s148 = scalar_lea.hbm %s0, %s147
          %s149 = sshll.u32 %s141, 4
          %s150 = int_to_ptr.vmem [resolvable:$true] %s149
          %155 = dma.hbm_to_vmem [thread:$0]  %s148, 1024, %s150, %s138, 128, 128, 8
        $region28: #{tpu_custom_call.1} parent=23 // pred_fallthru
          _
      $region24: #{tpu_custom_call.1} parent=5 // pred_fallthru
        _
      %p156 = scmp.le.s32.totalorder 1, %s15
      %p157 = scmp.lt.s32.totalorder %s15, 3
      %p158 = pnand %p156, %p157
      %p159 = pneg %p158
      // Predicated region
      $region29: #{tpu_custom_call.1} parent=5 // pred_check
        _
      $region30: #{tpu_custom_call.1} parent=5 // pred_check_branch
        %161 = sbr.rel (%p158) target = $region32
      $region31: #{tpu_custom_call.1} parent=5 // pred_region
        %s162 = ssub.s32 %s15, 1
        %s163 = sand.u32 %s28, 1
        %s164 = scalar_lea.sflag [#allocation4], %s163
        %s165 = sand.u32 %s28, 1
        %s166 = smul.addr %s165, 64
        %s167 = scalar_lea.vmem [#allocation3], %s166
        // Predicated region
        $region33: #{tpu_custom_call.1} parent=31 // pred_check
          %p168 = pneg %p41
        $region34: #{tpu_custom_call.1} parent=31 // pred_check_branch
          %170 = sbr.rel (%p168) target = $region36
        $region35: #{tpu_custom_call.1} parent=31 // pred_region
          %171 = dma.done %s164, 1024
        $region36: #{tpu_custom_call.1} parent=31 // pred_fallthru
          _
        %s172 = sand.u32 %s28, 1
        %s173 = scalar_lea.sflag [#allocation4], %s172
        %s174 = sand.u32 %s28, 1
        %s175 = smul.addr %s174, 64
        %s176 = scalar_lea.vmem [#allocation3], %s175
        %p177 = pneg %p41
        %p178 = pneg %p38
        %p179 = pneg %p62
        %p180 = pneg %p59
        %p181 = pneg %p83
        %p182 = pneg %p80
        %p183 = pneg %p109
        %p184 = pneg %p106
        %s185 = sand.u32 %s96, 1
        %s186 = scalar_lea.sflag [#allocation5], %s185
        %s187 = sand.u32 %s96, 1
        %s188 = smul.addr %s187, 32
        %s189 = scalar_lea.vmem [#allocation6], %s188
        %s190 = smul.u32 4, %s20
        %s191 = smul.u32 4, %s20
        %v193 = vld [vmem:[%s1] sm:$0xf]
        %v194 = vld [vmem:[%s2] sm:$0xf]
        %v195 = vld [vmem:[%s2 + $0x4] sm:$0xf]
        %v196 = vld [vmem:[%s167] sm:$0xff]
        %v197 = vld [vmem:[%s167 + $0x8] sm:$0xff]
        %v198 = vpack.c.bf16 %v197, %v196
        %vm199 = vcmask 130048
        %v201 = vsel %vm199, %v193, 0
        %203 = vmatprep.subr.bf16.mxu0 0
        %204 = vmatpush1.bf16.msra.mxu0 0
        %205 = vmatprep.subr.bf16.mxu0 0
        %206 = vmatpush1.bf16.msra.mxu0 0
        %207 = vmatprep.subr.bf16.mxu0 0
        %208 = vmatpush1.bf16.msra.mxu0 0
        %209 = vmatprep.subr.bf16.mxu0 0
        %210 = vmatpush1.bf16.msra.mxu0 0
        %211 = vmatprep.subr.bf16.mxu0 0
        %212 = vmatpush1.bf16.msra.mxu0 0
        %213 = vmatprep.subr.bf16.mxu0 0
        %214 = vmatpush1.bf16.msra.mxu0 0
        %215 = vmatprep.subr.bf16.mxu0 0
        %216 = vmatpush1.bf16.msra.mxu0 0
        %217 = vmatprep.subr.bf16.mxu0 0
        %218 = vmatpush1.bf16.msra.mxu0 %v198
        %219 = vmatprep.subr.bf16.mxu0 0
        %220 = vmatpush2.bf16.msra.mxu0 0
        %221 = vmatprep.subr.bf16.mxu0 0
        %222 = vmatpush2.bf16.msra.mxu0 0
        %223 = vmatprep.subr.bf16.mxu0 0
        %224 = vmatpush2.bf16.msra.mxu0 0
        %225 = vmatprep.subr.bf16.mxu0 0
        %226 = vmatpush2.bf16.msra.mxu0 0
        %227 = vmatprep.subr.bf16.mxu0 0
        %228 = vmatpush2.bf16.msra.mxu0 0
        %229 = vmatprep.subr.bf16.mxu0 0
        %230 = vmatpush2.bf16.msra.mxu0 0
        %231 = vmatprep.subr.bf16.mxu0 0
        %232 = vmatpush2.bf16.msra.mxu0 0
        %233 = vmatprep.subr.bf16.mxu0 0
        %234 = vmatpush2.bf16.msra.mxu0 0
        %235 = vmatprep.mubr.bf16.mxu0 0
        %236 = vmatmul.mubr.bf16.gmra.mxu0 %v201
        %v237 = vpop.f32.mrf.mxu0
        %v238 = vadd.f32 0.0, %v237
        %v239 = vpop.f32.mrf.mxu0
        %v240 = vpop.f32.mrf.mxu0
        %v241 = vpop.f32.mrf.mxu0
        %242 = vdwg.mxu0
        %v243 = vpack.c.bf16 %v238, %v238
        %vm244 = vcmask 125952
        %245 = vst.msk [vmem:[#allocation2] sm:$0xf] %vm244, %v243
        %s246 = scalar_lea.vmem %s167, 16 [#allocation3]
        %v247 = vld [vmem:[%s246] sm:$0xff]
        %v248 = vld [vmem:[%s246 + $0x8] sm:$0xff]
        %v249 = vpack.c.bf16 %v248, %v247
        %250 = vmatprep.subr.bf16.mxu0 0
        %251 = vmatpush1.bf16.msra.mxu0 0
        %252 = vmatprep.subr.bf16.mxu0 0
        %253 = vmatpush1.bf16.msra.mxu0 0
        %254 = vmatprep.subr.bf16.mxu0 0
        %255 = vmatpush1.bf16.msra.mxu0 0
        %256 = vmatprep.subr.bf16.mxu0 0
        %257 = vmatpush1.bf16.msra.mxu0 0
        %258 = vmatprep.subr.bf16.mxu0 0
        %259 = vmatpush1.bf16.msra.mxu0 0
        %260 = vmatprep.subr.bf16.mxu0 0
        %261 = vmatpush1.bf16.msra.mxu0 0
        %262 = vmatprep.subr.bf16.mxu0 0
        %263 = vmatpush1.bf16.msra.mxu0 0
        %264 = vmatprep.subr.bf16.mxu0 0
        %265 = vmatpush1.bf16.msra.mxu0 %v249
        %266 = vmatprep.subr.bf16.mxu0 0
        %267 = vmatpush2.bf16.msra.mxu0 0
        %268 = vmatprep.subr.bf16.mxu0 0
        %269 = vmatpush2.bf16.msra.mxu0 0
        %270 = vmatprep.subr.bf16.mxu0 0
        %271 = vmatpush2.bf16.msra.mxu0 0
        %272 = vmatprep.subr.bf16.mxu0 0
        %273 = vmatpush2.bf16.msra.mxu0 0
        %274 = vmatprep.subr.bf16.mxu0 0
        %275 = vmatpush2.bf16.msra.mxu0 0
        %276 = vmatprep.subr.bf16.mxu0 0
        %277 = vmatpush2.bf16.msra.mxu0 0
        %278 = vmatprep.subr.bf16.mxu0 0
        %279 = vmatpush2.bf16.msra.mxu0 0
        %280 = vmatprep.subr.bf16.mxu0 0
        %281 = vmatpush2.bf16.msra.mxu0 0
        %282 = vmatprep.mubr.bf16.mxu0 0
        %283 = vmatmul.mubr.bf16.gmra.mxu0 %v201
        %v284 = vpop.f32.mrf.mxu0
        %v285 = vadd.f32 0.0, %v284
        %v286 = vpop.f32.mrf.mxu0
        %v287 = vpop.f32.mrf.mxu0
        %v288 = vpop.f32.mrf.mxu0
        %289 = vdwg.mxu0
        %v290 = vpack.c.bf16 %v285, %v285
        %291 = vst.msk [vmem:[#allocation2 + $0x4] sm:$0xf] %vm244, %v290
        %s292 = scalar_lea.vmem %s167, 32 [#allocation3]
        %v293 = vld [vmem:[%s292] sm:$0xff]
        %v294 = vld [vmem:[%s292 + $0x8] sm:$0xff]
        %v295 = vpack.c.bf16 %v294, %v293
        %296 = vmatprep.subr.bf16.mxu0 0
        %297 = vmatpush1.bf16.msra.mxu0 0
        %298 = vmatprep.subr.bf16.mxu0 0
        %299 = vmatpush1.bf16.msra.mxu0 0
        %300 = vmatprep.subr.bf16.mxu0 0
        %301 = vmatpush1.bf16.msra.mxu0 0
        %302 = vmatprep.subr.bf16.mxu0 0
        %303 = vmatpush1.bf16.msra.mxu0 0
        %304 = vmatprep.subr.bf16.mxu0 0
        %305 = vmatpush1.bf16.msra.mxu0 0
        %306 = vmatprep.subr.bf16.mxu0 0
        %307 = vmatpush1.bf16.msra.mxu0 0
        %308 = vmatprep.subr.bf16.mxu0 0
        %309 = vmatpush1.bf16.msra.mxu0 0
        %310 = vmatprep.subr.bf16.mxu0 0
        %311 = vmatpush1.bf16.msra.mxu0 %v295
        %312 = vmatprep.subr.bf16.mxu0 0
        %313 = vmatpush2.bf16.msra.mxu0 0
        %314 = vmatprep.subr.bf16.mxu0 0
        %315 = vmatpush2.bf16.msra.mxu0 0
        %316 = vmatprep.subr.bf16.mxu0 0
        %317 = vmatpush2.bf16.msra.mxu0 0
        %318 = vmatprep.subr.bf16.mxu0 0
        %319 = vmatpush2.bf16.msra.mxu0 0
        %320 = vmatprep.subr.bf16.mxu0 0
        %321 = vmatpush2.bf16.msra.mxu0 0
        %322 = vmatprep.subr.bf16.mxu0 0
        %323 = vmatpush2.bf16.msra.mxu0 0
        %324 = vmatprep.subr.bf16.mxu0 0
        %325 = vmatpush2.bf16.msra.mxu0 0
        %326 = vmatprep.subr.bf16.mxu0 0
        %327 = vmatpush2.bf16.msra.mxu0 0
        %328 = vmatprep.mubr.bf16.mxu0 0
        %329 = vmatmul.mubr.bf16.gmra.mxu0 %v201
        %v330 = vpop.f32.mrf.mxu0
        %v331 = vadd.f32 0.0, %v330
        %v332 = vpop.f32.mrf.mxu0
        %v333 = vpop.f32.mrf.mxu0
        %v334 = vpop.f32.mrf.mxu0
        %335 = vdwg.mxu0
        %v336 = vpack.c.bf16 %v331, %v331
        %337 = vst.msk [vmem:[#allocation2 + $0x8] sm:$0xf] %vm244, %v336
        %s338 = scalar_lea.vmem %s167, 48 [#allocation3]
        %v339 = vld [vmem:[%s338] sm:$0xff]
        %v340 = vld [vmem:[%s338 + $0x8] sm:$0xff]
        %v341 = vpack.c.bf16 %v340, %v339
        %342 = vmatprep.subr.bf16.mxu0 0
        %343 = vmatpush1.bf16.msra.mxu0 0
        %344 = vmatprep.subr.bf16.mxu0 0
        %345 = vmatpush1.bf16.msra.mxu0 0
        %346 = vmatprep.subr.bf16.mxu0 0
        %347 = vmatpush1.bf16.msra.mxu0 0
        %348 = vmatprep.subr.bf16.mxu0 0
        %349 = vmatpush1.bf16.msra.mxu0 0
        %350 = vmatprep.subr.bf16.mxu0 0
        %351 = vmatpush1.bf16.msra.mxu0 0
        %352 = vmatprep.subr.bf16.mxu0 0
        %353 = vmatpush1.bf16.msra.mxu0 0
        %354 = vmatprep.subr.bf16.mxu0 0
        %355 = vmatpush1.bf16.msra.mxu0 0
        %356 = vmatprep.subr.bf16.mxu0 0
        %357 = vmatpush1.bf16.msra.mxu0 %v341
        %358 = vmatprep.subr.bf16.mxu0 0
        %359 = vmatpush2.bf16.msra.mxu0 0
        %360 = vmatprep.subr.bf16.mxu0 0
        %361 = vmatpush2.bf16.msra.mxu0 0
        %362 = vmatprep.subr.bf16.mxu0 0
        %363 = vmatpush2.bf16.msra.mxu0 0
        %364 = vmatprep.subr.bf16.mxu0 0
        %365 = vmatpush2.bf16.msra.mxu0 0
        %366 = vmatprep.subr.bf16.mxu0 0
        %367 = vmatpush2.bf16.msra.mxu0 0
        %368 = vmatprep.subr.bf16.mxu0 0
        %369 = vmatpush2.bf16.msra.mxu0 0
        %370 = vmatprep.subr.bf16.mxu0 0
        %371 = vmatpush2.bf16.msra.mxu0 0
        %372 = vmatprep.subr.bf16.mxu0 0
        %373 = vmatpush2.bf16.msra.mxu0 0
        %374 = vmatprep.mubr.bf16.mxu0 0
        %375 = vmatmul.mubr.bf16.gmra.mxu0 %v201
        %v376 = vpop.f32.mrf.mxu0
        %v377 = vadd.f32 0.0, %v376
        %v378 = vpop.f32.mrf.mxu0
        %v379 = vpop.f32.mrf.mxu0
        %v380 = vpop.f32.mrf.mxu0
        %381 = vdwg.mxu0
        %v382 = vpack.c.bf16 %v377, %v377
        %383 = vst.msk [vmem:[#allocation2 + $0xc] sm:$0xf] %vm244, %v382
        %v384 = vld [vmem:[#allocation2] sm:$0xf]
        %v385 = vld [vmem:[#allocation2 + $0x4] sm:$0xf]
        %v386 = vld [vmem:[#allocation2 + $0x8] sm:$0xf]
        %v387 = vld [vmem:[#allocation2 + $0xc] sm:$0xf]
        %v392 = vunpack.c.l.b16 %v384
        %v393 = vunpack.c.l.b16 %v385
        %v394 = vunpack.c.l.b16 %v386
        %v395 = vunpack.c.l.b16 %v387
        %v396 = vpack.c.b16 %v393, %v392
        %v397 = vpack.c.b16 %v395, %v394
        %v400 = vunpack.c.l.b16 %v194
        %v401 = vunpack.c.l.b16 %v195
        %v402 = vpack.c.b16 %v401, %v400
        %v405 = vsel %vm199, %v396, 0
        %v408 = vsel %vm199, %v397, 0
        %410 = vmatprep.subr.bf16.mxu0 0
        %411 = vmatpush1.bf16.msra.mxu0 0
        %412 = vmatprep.subr.bf16.mxu0 0
        %413 = vmatpush1.bf16.msra.mxu0 0
        %414 = vmatprep.subr.bf16.mxu0 0
        %415 = vmatpush1.bf16.msra.mxu0 0
        %416 = vmatprep.subr.bf16.mxu0 0
        %417 = vmatpush1.bf16.msra.mxu0 0
        %418 = vmatprep.subr.bf16.mxu0 0
        %419 = vmatpush1.bf16.msra.mxu0 0
        %420 = vmatprep.subr.bf16.mxu0 0
        %421 = vmatpush1.bf16.msra.mxu0 0
        %422 = vmatprep.subr.bf16.mxu0 0
        %423 = vmatpush1.bf16.msra.mxu0 0
        %424 = vmatprep.subr.bf16.mxu0 0
        %425 = vmatpush1.bf16.msra.mxu0 %v402
        %426 = vmatprep.subr.bf16.mxu0 0
        %427 = vmatpush2.bf16.msra.mxu0 0
        %428 = vmatprep.subr.bf16.mxu0 0
        %429 = vmatpush2.bf16.msra.mxu0 0
        %430 = vmatprep.subr.bf16.mxu0 0
        %431 = vmatpush2.bf16.msra.mxu0 0
        %432 = vmatprep.subr.bf16.mxu0 0
        %433 = vmatpush2.bf16.msra.mxu0 0
        %434 = vmatprep.subr.bf16.mxu0 0
        %435 = vmatpush2.bf16.msra.mxu0 0
        %436 = vmatprep.subr.bf16.mxu0 0
        %437 = vmatpush2.bf16.msra.mxu0 0
        %438 = vmatprep.subr.bf16.mxu0 0
        %439 = vmatpush2.bf16.msra.mxu0 0
        %440 = vmatprep.subr.bf16.mxu0 0
        %441 = vmatpush2.bf16.msra.mxu0 0
        %442 = vmatprep.mubr.bf16.mxu0 0
        %443 = vmatmul.mubr.bf16.gmra.mxu0 %v405
        %v444 = vpop.f32.mrf.mxu0
        %v445 = vadd.f32 0.0, %v444
        %v446 = vpop.f32.mrf.mxu0
        %v447 = vpop.f32.mrf.mxu0
        %v448 = vadd.f32 0.0, %v447
        %v449 = vpop.f32.mrf.mxu0
        %450 = vmatprep.mubr.bf16.mxu0 0
        %451 = vmatmul.mubr.bf16.gmra.mxu0 %v408
        %v452 = vpop.f32.mrf.mxu0
        %v453 = vadd.f32 0.0, %v452
        %v454 = vpop.f32.mrf.mxu0
        %v455 = vpop.f32.mrf.mxu0
        %v456 = vadd.f32 0.0, %v455
        %v457 = vpop.f32.mrf.mxu0
        %458 = vdwg.mxu0
        %vm459 = vcmask 64512
        %460 = vst.msk [vmem:[%s189] sm:$0xff] %vm459, %v445
        %461 = vst.msk [vmem:[%s189 + $0x8] sm:$0xff] %vm459, %v448
        %462 = vst.msk [vmem:[%s189 + $0x10] sm:$0xff] %vm459, %v453
        %463 = vst.msk [vmem:[%s189 + $0x18] sm:$0xff] %vm459, %v456
        %s464 = sand.u32 %s96, 1
        %s465 = scalar_lea.sflag [#allocation5], %s464
        %s466 = sand.u32 %s96, 1
        %s467 = smul.addr %s466, 32
        %s468 = scalar_lea.vmem [#allocation6], %s467
        // Predicated region
        $region37: #{tpu_custom_call.1} parent=31 // pred_check
          %p469 = pneg %p106
        $region38: #{tpu_custom_call.1} parent=31 // pred_check_branch
          %471 = sbr.rel (%p469) target = $region40
        $region39: #{tpu_custom_call.1} parent=31 // pred_region
          %s472 = smul.u32 4, %s20
          %s474 = ssub.s32 512, 512
          %475 = vsyncadd %s465, %s474
          %s476 = smul.addr %s472, 128
          %s477 = scalar_lea.hbm %s3, %s476
          %s478 = sshll.u32 %s468, 4
          %s479 = int_to_ptr.vmem [resolvable:$true] %s478
          %484 = dma.vmem_to_hbm [thread:$0]  %s479, 512, %s477, %s465, 128, 128, 8
        $region40: #{tpu_custom_call.1} parent=31 // pred_fallthru
          _
      $region32: #{tpu_custom_call.1} parent=5 // pred_fallthru
        _
      %p485 = scmp.le.s32.totalorder 2, %s15
      // Predicated region
      $region41: #{tpu_custom_call.1} parent=5 // pred_check
        %p486 = pneg %p485
      $region42: #{tpu_custom_call.1} parent=5 // pred_check_branch
        %488 = sbr.rel (%p486) target = $region44
      $region43: #{tpu_custom_call.1} parent=5 // pred_region
        %s489 = ssub.s32 %s15, 2
        // Predicated region
        $region45: #{tpu_custom_call.1} parent=43 // pred_check
          %p490 = pneg %p112
        $region46: #{tpu_custom_call.1} parent=43 // pred_check_branch
          %492 = sbr.rel (%p490) target = $region48
        $region47: #{tpu_custom_call.1} parent=43 // pred_region
          %s493 = sand.u32 %s97, 1
          %s494 = scalar_lea.sflag [#allocation5], %s493
          %s495 = sand.u32 %s97, 1
          %s496 = smul.addr %s495, 32
          %s497 = scalar_lea.vmem [#allocation6], %s496
          %498 = dma.done %s494, 512
        $region48: #{tpu_custom_call.1} parent=43 // pred_fallthru
          _
      $region44: #{tpu_custom_call.1} parent=5 // pred_fallthru
        _
    $region6: #{tpu_custom_call.1} parent=1 // loop_footer
      %s19 = sadd.s32 1, %s15
    $region7: #{tpu_custom_call.1} parent=1 // loop_footer_branch
      %14 = sbr.rel target = $region3
    $region8: #{tpu_custom_call.1} parent=1 // loop_exit
      _
    %499 = vsyncpa [#allocation4], 1
    %s500 = scalar_lea.sflag [#allocation4], 1
    %501 = vsyncpa %s500, 1
    %502 = vsyncpa [#allocation5], 1
    %s503 = scalar_lea.sflag [#allocation5], 1
    %504 = vsyncpa %s503, 1

</llo_original>
